<compile_context>
chip_gen: v7x
topology: tpu7x:2x2x1
jax: 0.10.0
libtpu: 0.0.40
codegen_flags: <defaults>
</compile_context>

<pallas_src>
import jax
import jax.numpy as jnp
from jax.experimental import pallas as pl
from jax.experimental.pallas import tpu as pltpu

LATENT_DIM = 32
HIDDEN = 50        # logical hidden width (matches nn.Linear(latent_dim, 50))
HIDDEN_PAD = 64    # sublane/lane-friendly padded width (zero-filled)
PACK = 128 // LATENT_DIM   # 4 logical rows packed per 128-lane row


def odefunc_kernel(y_ref, w1_ref, b1_ref, w2_ref, b2_ref, out_ref):
    # Two MXU matmuls + bias adds + tanh; everything resident in VMEM.
    y = y_ref[...]                                          # [tile_q, 128]
    h = jnp.dot(y, w1_ref[...],
                preferred_element_type=jnp.float32)         # [tile_q, 256]
    h = jnp.tanh(h + b1_ref[...].astype(jnp.float32))       # broadcast [1, 256]
    h = h.astype(w2_ref.dtype)                              # no-op for f32; bf16 path
    o = jnp.dot(h, w2_ref[...],
                preferred_element_type=jnp.float32)         # [tile_q, 128]
    out_ref[...] = (o + b2_ref[...].astype(jnp.float32)).astype(out_ref.dtype)


def _block_diag(w, pack):
    """pack-way block-diagonal copy of w (exact zeros off the diagonal blocks)."""
    rows, cols = w.shape
    out = jnp.zeros((pack * rows, pack * cols), w.dtype)
    for k in range(pack):
        out = out.at[k * rows:(k + 1) * rows, k * cols:(k + 1) * cols].set(w)
    return out


def init_params(key, latent_dim=LATENT_DIM, hidden=HIDDEN,
                hidden_pad=HIDDEN_PAD, pack=PACK, std=0.1, dtype=jnp.float32):
    """Matches init_network_weights: normal(0, 0.1) weights, zero biases.

    Returns (kernel_params, ref_params):
      kernel_params: block-diagonal, hidden-padded, [in,out]-layout weights for
                     the Pallas kernel (cast to `dtype`; keep float32 for strict
                     parity, bfloat16 only on v6e/v7x).
      ref_params:    unpadded logical f32 weights for the plain-JAX reference.
    """
    k1, k2 = jax.random.split(key)
    # PyTorch Linear weight is [out, in]; store transposed as [in, out].
    w1_t = jax.random.normal(k1, (hidden, latent_dim), jnp.float32) * std
    w2_t = jax.random.normal(k2, (latent_dim, hidden), jnp.float32) * std
    b1_log = jnp.zeros((1, hidden), jnp.float32)
    b2_log = jnp.zeros((1, latent_dim), jnp.float32)

    # Zero-pad hidden 50 -> 64 (mathematically inert: tanh(0) * 0 contributes 0).
    w1 = jnp.zeros((latent_dim, hidden_pad), jnp.float32).at[:, :hidden].set(w1_t.T)
    w2 = jnp.zeros((hidden_pad, latent_dim), jnp.float32).at[:hidden, :].set(w2_t.T)
    b1 = jnp.zeros((1, hidden_pad), jnp.float32)
    b2 = jnp.zeros((1, latent_dim), jnp.float32)

    # 4-way block-diagonal so packed [.,128] rows stay lane-dense end to end.
    w1bd = _block_diag(w1, pack)            # [128, 256]
    w2bd = _block_diag(w2, pack)            # [256, 128]
    b1bd = jnp.tile(b1, (1, pack))          # [1, 256]
    b2bd = jnp.tile(b2, (1, pack))          # [1, 128]

    kernel_params = tuple(p.astype(dtype) for p in (w1bd, b1bd, w2bd, b2bd))
    ref_params = (w1_t.T, b1_log, w2_t.T, b2_log)
    return kernel_params, ref_params


def odefunc_forward(t, y, params, *, tile_rows=8192):
    """Computes gradient_net(y). `t` is unused (ODE time argument), kept for parity."""
    del t
    w1bd, b1bd, w2bd, b2bd = params
    B, D = y.shape
    pack = w1bd.shape[0] // D               # 4
    lanes = pack * D                        # 128
    hp = w1bd.shape[1]                      # 256

    out_dtype = y.dtype
    if y.dtype != w1bd.dtype:               # optional bf16 streaming path
        y = y.astype(w1bd.dtype)

    # ---- tile selection in packed-row space (1 packed row = `pack` samples) ----
    Bq = -(-B // pack)                              # packed rows needed
    target_q = max(8, (tile_rows // pack) // 8 * 8)  # large tile: amortize grid overhead
    if Bq > target_q:
        tile_q = target_q
    elif Bq >= 16:
        # Ensure >=2 grid steps so the "parallel" axis can span both v7x TensorCores.
        tile_q = ((-(-Bq // 2)) + 7) // 8 * 8
    else:
        tile_q = ((Bq + 7) // 8) * 8
    grid = -(-Bq // tile_q)
    Bq_pad = grid * tile_q
    Bp = Bq_pad * pack                               # padded logical batch

    y_p = jnp.pad(y, ((0, Bp - B), (0, 0))) if Bp != B else y
    y_packed = y_p.reshape(Bq_pad, lanes)            # free row-major view

    in_isz = jnp.dtype(y_packed.dtype).itemsize
    out_isz = jnp.dtype(out_dtype).itemsize
    w_bytes = sum(jnp.dtype(p.dtype).itemsize * p.size for p in params)

    out = pl.pallas_call(
        odefunc_kernel,
        out_shape=jax.ShapeDtypeStruct((Bq_pad, lanes), out_dtype),
        grid=(grid,),
        in_specs=[
            pl.BlockSpec((tile_q, lanes), lambda i: (i, 0)),  # y tiles, pipelined
            pl.BlockSpec((lanes, hp), lambda i: (0, 0)),      # weights: constant block
            pl.BlockSpec((1, hp), lambda i: (0, 0)),          #   index -> VMEM-resident
            pl.BlockSpec((hp, lanes), lambda i: (0, 0)),
            pl.BlockSpec((1, lanes), lambda i: (0, 0)),
        ],
        out_specs=pl.BlockSpec((tile_q, lanes), lambda i: (i, 0)),
        compiler_params=pltpu.CompilerParams(
            dimension_semantics=("parallel",)),
        cost_estimate=pl.CostEstimate(
            flops=2 * Bq_pad * (lanes * hp + hp * lanes),
            transcendentals=Bq_pad * hp,
            bytes_accessed=(y_packed.size * in_isz
                            + Bq_pad * lanes * out_isz
                            + w_bytes),
        ),
    )(y_packed, w1bd, b1bd, w2bd, b2bd)

    out = out.reshape(Bp, D)
    return out[:B] if Bp != B else out


def _reference(y, ref_params):
    # Plain-JAX reference on the UNPADDED logical weights.
    w1, b1, w2, b2 = ref_params
    h = jnp.tanh(y @ w1 + b1)
    return h @ w2 + b2


if __name__ == "__main__":
    key = jax.random.PRNGKey(0)
    kp, ky1, ky2 = jax.random.split(key, 3)

    params, ref_params = init_params(kp)     # float32: strict parity with PyTorch init
    t = jnp.float32(0.0)                     # unused, matches forward(t, y) signature

    # Small-batch case (single grid step, batch padded to one 8x128 packed tile).
    batch = 8
    y = jax.random.normal(ky1, (batch, LATENT_DIM), jnp.float32)
    out = odefunc_forward(t, y, params)
    jax.block_until_ready(out)
    assert out.shape == (batch, LATENT_DIM)
    assert jnp.allclose(out, _reference(y, ref_params), atol=1e-5, rtol=1e-5)

    # Non-tile-multiple batch: exercises batch padding and the >=2-step grid path.
    batch2 = 200
    y2 = jax.random.normal(ky2, (batch2, LATENT_DIM), jnp.float32)
    out2 = odefunc_forward(t, y2, params)
    jax.block_until_ready(out2)
    assert out2.shape == (batch2, LATENT_DIM)
    assert jnp.allclose(out2, _reference(y2, ref_params), atol=1e-5, rtol=1e-5)

    # Same batch with a small tile_rows to exercise the streaming (Bq > target) path.
    out3 = odefunc_forward(t, y2, params, tile_rows=128)
    jax.block_until_ready(out3)
    assert jnp.allclose(out3, _reference(y2, ref_params), atol=1e-5, rtol=1e-5)

    print("KERNEL_OK")
</pallas_src>

<mosaic_0001>
module attributes {stable_mosaic.version = 11 : i64} {
  func.func @odefunc_kernel(%arg0: i32, %arg1: memref<8x128xf32, #tpu.memory_space<vmem>>, %arg2: memref<128x256xf32, #tpu.memory_space<vmem>>, %arg3: memref<1x256xf32, #tpu.memory_space<vmem>>, %arg4: memref<256x128xf32, #tpu.memory_space<vmem>>, %arg5: memref<1x128xf32, #tpu.memory_space<vmem>>, %arg6: memref<8x128xf32, #tpu.memory_space<vmem>>) attributes {dimension_semantics = [#tpu.dimension_semantics<parallel>], iteration_bounds = array<i64: 1>, scalar_prefetch = 0 : i64, scratch_operands = 0 : i64, tpu.core_type = #tpu.core_type<tc>, window_params = [{transform_indices = @transform_0, window_bounds = array<i64: 8, 128>}, {pipeline_mode = #tpu.pipeline_mode<synchronous>, transform_indices = @transform_1, window_bounds = array<i64: 128, 256>}, {pipeline_mode = #tpu.pipeline_mode<synchronous>, transform_indices = @transform_2, window_bounds = array<i64: 1, 256>}, {pipeline_mode = #tpu.pipeline_mode<synchronous>, transform_indices = @transform_3, window_bounds = array<i64: 256, 128>}, {pipeline_mode = #tpu.pipeline_mode<synchronous>, transform_indices = @transform_4, window_bounds = array<i64: 1, 128>}, {transform_indices = @transform_5, window_bounds = array<i64: 8, 128>}]} {
    %c0 = arith.constant 0 : index
    %c0_0 = arith.constant 0 : index
    %0 = vector.load %arg1[%c0, %c0_0] : memref<8x128xf32, #tpu.memory_space<vmem>>, vector<8x128xf32>
    %c0_1 = arith.constant 0 : index
    %c0_2 = arith.constant 0 : index
    %1 = vector.load %arg2[%c0_1, %c0_2] : memref<128x256xf32, #tpu.memory_space<vmem>>, vector<128x256xf32>
    %cst = arith.constant dense<0.000000e+00> : vector<8x256xf32>
    %2 = tpu.matmul %0, %1, %cst {dimension_numbers = #tpu.dot_dimension_numbers<[1], [0], [0], [1], [0, 0, 1, 1], [], []>} : vector<8x128xf32>, vector<128x256xf32>, vector<8x256xf32> -> vector<8x256xf32>
    %c0_3 = arith.constant 0 : index
    %c0_4 = arith.constant 0 : index
    %3 = vector.load %arg3[%c0_3, %c0_4] : memref<1x256xf32, #tpu.memory_space<vmem>>, vector<1x256xf32>
    %4 = vector.broadcast %3 : vector<1x256xf32> to vector<8x256xf32>
    %5 = arith.addf %2, %4 : vector<8x256xf32>
    %6 = math.tanh %5 : vector<8x256xf32>
    %c0_5 = arith.constant 0 : index
    %c0_6 = arith.constant 0 : index
    %7 = vector.load %arg4[%c0_5, %c0_6] : memref<256x128xf32, #tpu.memory_space<vmem>>, vector<256x128xf32>
    %cst_7 = arith.constant dense<0.000000e+00> : vector<8x128xf32>
    %8 = tpu.matmul %6, %7, %cst_7 {dimension_numbers = #tpu.dot_dimension_numbers<[1], [0], [0], [1], [0, 0, 1, 1], [], []>} : vector<8x256xf32>, vector<256x128xf32>, vector<8x128xf32> -> vector<8x128xf32>
    %c0_8 = arith.constant 0 : index
    %c0_9 = arith.constant 0 : index
    %9 = vector.load %arg5[%c0_8, %c0_9] : memref<1x128xf32, #tpu.memory_space<vmem>>, vector<1x128xf32>
    %10 = vector.broadcast %9 : vector<1x128xf32> to vector<8x128xf32>
    %11 = arith.addf %8, %10 : vector<8x128xf32>
    %c0_10 = arith.constant 0 : index
    %c0_11 = arith.constant 0 : index
    %12 = vector.load %arg6[%c0_10, %c0_11] : memref<8x128xf32, #tpu.memory_space<vmem>>, vector<8x128xf32>
    tpu.vector_store %arg6[%c0_10, %c0_11], %11 {strides = array<i32>} : memref<8x128xf32, #tpu.memory_space<vmem>>, vector<8x128xf32>,
    return
  }
  func.func @transform_0(%arg0: i32) -> (i32, i32) {
    %c0_i32 = arith.constant 0 : i32
    %c0_i32_0 = arith.constant 0 : i32
    return %arg0, %c0_i32 : i32, i32
  }
  func.func @transform_1(%arg0: i32) -> (i32, i32) {
    %c0_i32 = arith.constant 0 : i32
    %c0_i32_0 = arith.constant 0 : i32
    %c0_i32_1 = arith.constant 0 : i32
    return %c0_i32, %c0_i32_0 : i32, i32
  }
  func.func @transform_2(%arg0: i32) -> (i32, i32) {
    %c0_i32 = arith.constant 0 : i32
    %c0_i32_0 = arith.constant 0 : i32
    %c0_i32_1 = arith.constant 0 : i32
    return %c0_i32, %c0_i32_0 : i32, i32
  }
  func.func @transform_3(%arg0: i32) -> (i32, i32) {
    %c0_i32 = arith.constant 0 : i32
    %c0_i32_0 = arith.constant 0 : i32
    %c0_i32_1 = arith.constant 0 : i32
    return %c0_i32, %c0_i32_0 : i32, i32
  }
  func.func @transform_4(%arg0: i32) -> (i32, i32) {
    %c0_i32 = arith.constant 0 : i32
    %c0_i32_0 = arith.constant 0 : i32
    %c0_i32_1 = arith.constant 0 : i32
    return %c0_i32, %c0_i32_0 : i32, i32
  }
  func.func @transform_5(%arg0: i32) -> (i32, i32) {
    %c0_i32 = arith.constant 0 : i32
    %c0_i32_0 = arith.constant 0 : i32
    return %arg0, %c0_i32 : i32, i32
  }
}

</mosaic_0001>

<llo_original>
// kernel: tpu_custom_call.1
$region0: #{tpu_custom_call.1}
  #allocation0 [shape = 'u32[]', space=smem, size = 0x4, offset = 0x4, fixed_abs, tag = 'smem constant byte address 0x4 - core index']
  #allocation1 [shape = 'u32[144,128]{1,0:T(1,128)}', space=vmem, size = 0x12000, scoped, tag = 'internal scratch']
  %s0 = inlined_call_operand.hbm [shape: f32[8,128], index: 0, kind: input, shape index: {}]
  %s1 = inlined_call_operand.hbm [shape: f32[128,256], index: 1, kind: input, shape index: {}]
  %s2 = inlined_call_operand.vmem [shape: f32[1,256], index: 2, kind: input, shape index: {}]
  %s3 = inlined_call_operand.hbm [shape: f32[256,128], index: 3, kind: input, shape index: {}]
  %s4 = inlined_call_operand.vmem [shape: f32[1,128], index: 4, kind: input, shape index: {}]
  %s5 = inlined_call_operand.hbm [shape: f32[8,128], index: 5, kind: output, shape index: {}]
  %s6 = sld [smem:[#allocation0]]
  $region42: #{tpu_custom_call.1} parent=0
    _
  %s8 = ssub.s32 1, %s6
  %s9 = scalar_select 0, %s8, %s6
  $region1: #{tpu_custom_call.1} parent=0
    #allocation2 [shape = 'u8[4096]{0}', space=vmem, size = 0x1000, scoped, tag = 'input window, operand 0, single buffered']
    #allocation3 [shape = 's32[1]{0}', space=sflag, size = 0x4, scoped, tag = 'scoped memory for tpu_custom_call.1']
    #allocation4 [shape = 's32[1]{0}', space=sflag, size = 0x4, scoped, tag = 'scoped memory for tpu_custom_call.1']
    #allocation5 [shape = 'u8[131072]{0}', space=vmem, size = 0x20000, scoped, tag = 'input window, operand 1, single buffered']
    #allocation6 [shape = 's32[1]{0}', space=sflag, size = 0x4, scoped, tag = 'scoped memory for tpu_custom_call.1']
    #allocation7 [shape = 'u8[131072]{0}', space=vmem, size = 0x20000, scoped, tag = 'input window, operand 3, single buffered']
    #allocation8 [shape = 'u8[4096]{0}', space=vmem, size = 0x1000, scoped, tag = 'output window, operand 0, single buffered']
    %10 = vsyncpa [#allocation3], 0
    %11 = vsyncpa [#allocation6], 0
    %12 = vsyncpa [#allocation4], 0
    // Predicated region
    $region2: #{tpu_custom_call.1} parent=1 // pred_check
      _
    $region3: #{tpu_custom_call.1} parent=1 // pred_check_branch
      %14 = sbr.rel (0) target = $region5
    $region4: #{tpu_custom_call.1} parent=1 // pred_region
      %s16 = ssub.s32 128, 128
      %17 = vsyncadd [#allocation3], %s16
      %s19 = sshll.u32 [#allocation2], 4
      %s20 = int_to_ptr.vmem [resolvable:$true] %s19
      %22 = dma.hbm_to_vmem [thread:$0]  %s0, 128, %s20, [#allocation3]
    $region5: #{tpu_custom_call.1} parent=1 // pred_fallthru
      _
    // Predicated region
    $region6: #{tpu_custom_call.1} parent=1 // pred_check
      _
    $region7: #{tpu_custom_call.1} parent=1 // pred_check_branch
      %24 = sbr.rel (0) target = $region9
    $region8: #{tpu_custom_call.1} parent=1 // pred_region
      %s26 = ssub.s32 4096, 4096
      %27 = vsyncadd [#allocation6], %s26
      %s28 = sshll.u32 [#allocation5], 4
      %s29 = int_to_ptr.vmem [resolvable:$true] %s28
      %34 = dma.hbm_to_vmem [thread:$0]  %s1, 4096, %s29, [#allocation6], 256, 256, 16
    $region9: #{tpu_custom_call.1} parent=1 // pred_fallthru
      _
    // Predicated region
    $region10: #{tpu_custom_call.1} parent=1 // pred_check
      _
    $region11: #{tpu_custom_call.1} parent=1 // pred_check_branch
      %36 = sbr.rel (0) target = $region13
    $region12: #{tpu_custom_call.1} parent=1 // pred_region
      _
    $region13: #{tpu_custom_call.1} parent=1 // pred_fallthru
      _
    // Predicated region
    $region14: #{tpu_custom_call.1} parent=1 // pred_check
      _
    $region15: #{tpu_custom_call.1} parent=1 // pred_check_branch
      %38 = sbr.rel (0) target = $region17
    $region16: #{tpu_custom_call.1} parent=1 // pred_region
      %s40 = ssub.s32 4096, 4096
      %41 = vsyncadd [#allocation6], %s40
      %s42 = sshll.u32 [#allocation7], 4
      %s43 = int_to_ptr.vmem [resolvable:$true] %s42
      %48 = dma.hbm_to_vmem [thread:$0]  %s3, 4096, %s43, [#allocation6], 128, 128, 8
    $region17: #{tpu_custom_call.1} parent=1 // pred_fallthru
      _
    // Predicated region
    $region18: #{tpu_custom_call.1} parent=1 // pred_check
      _
    $region19: #{tpu_custom_call.1} parent=1 // pred_check_branch
      %50 = sbr.rel (0) target = $region21
    $region20: #{tpu_custom_call.1} parent=1 // pred_region
      _
    $region21: #{tpu_custom_call.1} parent=1 // pred_fallthru
      _
    // Predicated region
    $region22: #{tpu_custom_call.1} parent=1 // pred_check
      _
    $region23: #{tpu_custom_call.1} parent=1 // pred_check_branch
      %52 = sbr.rel (0) target = $region25
    $region24: #{tpu_custom_call.1} parent=1 // pred_region
      %53 = dma.done [#allocation3], 128
    $region25: #{tpu_custom_call.1} parent=1 // pred_fallthru
      _
    // Predicated region
    $region26: #{tpu_custom_call.1} parent=1 // pred_check
      _
    $region27: #{tpu_custom_call.1} parent=1 // pred_check_branch
      %55 = sbr.rel (0) target = $region29
    $region28: #{tpu_custom_call.1} parent=1 // pred_region
      %56 = dma.done [#allocation6], 4096
    $region29: #{tpu_custom_call.1} parent=1 // pred_fallthru
      _
    // Predicated region
    $region30: #{tpu_custom_call.1} parent=1 // pred_check
      _
    $region31: #{tpu_custom_call.1} parent=1 // pred_check_branch
      %58 = sbr.rel (0) target = $region33
    $region32: #{tpu_custom_call.1} parent=1 // pred_region
      %59 = dma.done [#allocation6], 4096
    $region33: #{tpu_custom_call.1} parent=1 // pred_fallthru
      _
    %v60 = vld [vmem:[#allocation2] sm:$0xff]
    %v61 = vld [vmem:[#allocation5] sm:$0xff]
    %v62 = vld [vmem:[#allocation5 + $0x8] sm:$0xff]
    %v63 = vld [vmem:[#allocation5 + $0x10] sm:$0xff]
    %v64 = vld [vmem:[#allocation5 + $0x18] sm:$0xff]
    %v65 = vld [vmem:[#allocation5 + $0x20] sm:$0xff]
    %v66 = vld [vmem:[#allocation5 + $0x28] sm:$0xff]
    %v67 = vld [vmem:[#allocation5 + $0x30] sm:$0xff]
    %v68 = vld [vmem:[#allocation5 + $0x38] sm:$0xff]
    %v69 = vld [vmem:[#allocation5 + $0x40] sm:$0xff]
    %v70 = vld [vmem:[#allocation5 + $0x48] sm:$0xff]
    %v71 = vld [vmem:[#allocation5 + $0x50] sm:$0xff]
    %v72 = vld [vmem:[#allocation5 + $0x58] sm:$0xff]
    %v73 = vld [vmem:[#allocation5 + $0x60] sm:$0xff]
    %v74 = vld [vmem:[#allocation5 + $0x68] sm:$0xff]
    %v75 = vld [vmem:[#allocation5 + $0x70] sm:$0xff]
    %v76 = vld [vmem:[#allocation5 + $0x78] sm:$0xff]
    %v77 = vld [vmem:[#allocation5 + $0x80] sm:$0xff]
    %v78 = vld [vmem:[#allocation5 + $0x88] sm:$0xff]
    %v79 = vld [vmem:[#allocation5 + $0x90] sm:$0xff]
    %v80 = vld [vmem:[#allocation5 + $0x98] sm:$0xff]
    %v81 = vld [vmem:[#allocation5 + $0xa0] sm:$0xff]
    %v82 = vld [vmem:[#allocation5 + $0xa8] sm:$0xff]
    %v83 = vld [vmem:[#allocation5 + $0xb0] sm:$0xff]
    %v84 = vld [vmem:[#allocation5 + $0xb8] sm:$0xff]
    %v85 = vld [vmem:[#allocation5 + $0xc0] sm:$0xff]
    %v86 = vld [vmem:[#allocation5 + $0xc8] sm:$0xff]
    %v87 = vld [vmem:[#allocation5 + $0xd0] sm:$0xff]
    %v88 = vld [vmem:[#allocation5 + $0xd8] sm:$0xff]
    %v89 = vld [vmem:[#allocation5 + $0xe0] sm:$0xff]
    %v90 = vld [vmem:[#allocation5 + $0xe8] sm:$0xff]
    %v91 = vld [vmem:[#allocation5 + $0xf0] sm:$0xff]
    %v92 = vld [vmem:[#allocation5 + $0xf8] sm:$0xff]
    %v93 = vld [vmem:[%s2] sm:$0x3]
    %v95 = vlaneseq
    %v96 = vshrl.u32 %v95, 7
    %v97 = vsub.s32 0, %v96
    %v98 = vrot.slane %v93, %v97
    %v99 = vlaneseq
    %v100 = vshrl.u32 %v99, 7
    %v101 = vsub.s32 1, %v100
    %v102 = vrot.slane %v93, %v101
    %105 = vmatprep.subr.mxu0 %v62
    %106 = vmatpush1.msra.mxu0 %v61
    %107 = vmatprep.subr.mxu0 %v64
    %108 = vmatpush1.msra.mxu0 %v63
    %109 = vmatprep.subr.mxu0 %v66
    %110 = vmatpush1.msra.mxu0 %v65
    %111 = vmatprep.subr.mxu0 %v68
    %112 = vmatpush1.msra.mxu0 %v67
    %113 = vmatprep.subr.mxu0 %v70
    %114 = vmatpush1.msra.mxu0 %v69
    %115 = vmatprep.subr.mxu0 %v72
    %116 = vmatpush1.msra.mxu0 %v71
    %117 = vmatprep.subr.mxu0 %v74
    %118 = vmatpush1.msra.mxu0 %v73
    %119 = vmatprep.subr.mxu0 %v76
    %120 = vmatpush1.msra.mxu0 %v75
    %121 = vmatprep.subr.mxu0 %v78
    %122 = vmatpush1.msra.mxu0 %v77
    %123 = vmatprep.subr.mxu0 %v80
    %124 = vmatpush1.msra.mxu0 %v79
    %125 = vmatprep.subr.mxu0 %v82
    %126 = vmatpush1.msra.mxu0 %v81
    %127 = vmatprep.subr.mxu0 %v84
    %128 = vmatpush1.msra.mxu0 %v83
    %129 = vmatprep.subr.mxu0 %v86
    %130 = vmatpush1.msra.mxu0 %v85
    %131 = vmatprep.subr.mxu0 %v88
    %132 = vmatpush1.msra.mxu0 %v87
    %133 = vmatprep.subr.mxu0 %v90
    %134 = vmatpush1.msra.mxu0 %v89
    %135 = vmatprep.subr.mxu0 %v92
    %136 = vmatpush1.msra.mxu0 %v91
    %137 = vmatprep.subr.mxu0 0.0
    %138 = vmatpush1.msra.mxu0 0.0
    %139 = vmatprep.subr.mxu0 0.0
    %140 = vmatpush1.msra.mxu0 0.0
    %141 = vmatprep.subr.mxu0 0.0
    %142 = vmatpush1.msra.mxu0 0.0
    %143 = vmatprep.subr.mxu0 0.0
    %144 = vmatpush1.msra.mxu0 0.0
    %145 = vmatprep.subr.mxu0 0.0
    %146 = vmatpush1.msra.mxu0 0.0
    %147 = vmatprep.subr.mxu0 0.0
    %148 = vmatpush1.msra.mxu0 0.0
    %149 = vmatprep.subr.mxu0 0.0
    %150 = vmatpush1.msra.mxu0 0.0
    %151 = vmatprep.subr.mxu0 0.0
    %152 = vmatpush1.msra.mxu0 0.0
    %153 = vmatprep.subr.mxu0 0.0
    %154 = vmatpush1.msra.mxu0 0.0
    %155 = vmatprep.subr.mxu0 0.0
    %156 = vmatpush1.msra.mxu0 0.0
    %157 = vmatprep.subr.mxu0 0.0
    %158 = vmatpush1.msra.mxu0 0.0
    %159 = vmatprep.subr.mxu0 0.0
    %160 = vmatpush1.msra.mxu0 0.0
    %161 = vmatprep.subr.mxu0 0.0
    %162 = vmatpush1.msra.mxu0 0.0
    %163 = vmatprep.subr.mxu0 0.0
    %164 = vmatpush1.msra.mxu0 0.0
    %165 = vmatprep.subr.mxu0 0.0
    %166 = vmatpush1.msra.mxu0 0.0
    %167 = vmatprep.subr.mxu0 0.0
    %168 = vmatpush1.msra.mxu0 0.0
    %169 = vmatprep.mubr.f32.mxu0 0.0
    %170 = vmatmul.mubr.f32.gmra.mrb[0].mxu0 %v60
    %v171 = vpop.f32.mrb[0].mxu0
    %v172 = vadd.f32 %v98, %v171
    %v173 = vpop.f32.mrb[0].mxu0
    %v174 = vadd.f32 %v102, %v173
    %175 = vdwg.mxu0
    %v176 = vtanh.pop %v172
    %v177 = vtanh.pop %v174
    %v178 = vld [vmem:[#allocation7] sm:$0xff]
    %v179 = vld [vmem:[#allocation7 + $0x8] sm:$0xff]
    %v180 = vld [vmem:[#allocation7 + $0x10] sm:$0xff]
    %v181 = vld [vmem:[#allocation7 + $0x18] sm:$0xff]
    %v182 = vld [vmem:[#allocation7 + $0x20] sm:$0xff]
    %v183 = vld [vmem:[#allocation7 + $0x28] sm:$0xff]
    %v184 = vld [vmem:[#allocation7 + $0x30] sm:$0xff]
    %v185 = vld [vmem:[#allocation7 + $0x38] sm:$0xff]
    %v186 = vld [vmem:[#allocation7 + $0x40] sm:$0xff]
    %v187 = vld [vmem:[#allocation7 + $0x48] sm:$0xff]
    %v188 = vld [vmem:[#allocation7 + $0x50] sm:$0xff]
    %v189 = vld [vmem:[#allocation7 + $0x58] sm:$0xff]
    %v190 = vld [vmem:[#allocation7 + $0x60] sm:$0xff]
    %v191 = vld [vmem:[#allocation7 + $0x68] sm:$0xff]
    %v192 = vld [vmem:[#allocation7 + $0x70] sm:$0xff]
    %v193 = vld [vmem:[#allocation7 + $0x78] sm:$0xff]
    %v194 = vld [vmem:[#allocation7 + $0x80] sm:$0xff]
    %v195 = vld [vmem:[#allocation7 + $0x88] sm:$0xff]
    %v196 = vld [vmem:[#allocation7 + $0x90] sm:$0xff]
    %v197 = vld [vmem:[#allocation7 + $0x98] sm:$0xff]
    %v198 = vld [vmem:[#allocation7 + $0xa0] sm:$0xff]
    %v199 = vld [vmem:[#allocation7 + $0xa8] sm:$0xff]
    %v200 = vld [vmem:[#allocation7 + $0xb0] sm:$0xff]
    %v201 = vld [vmem:[#allocation7 + $0xb8] sm:$0xff]
    %v202 = vld [vmem:[#allocation7 + $0xc0] sm:$0xff]
    %v203 = vld [vmem:[#allocation7 + $0xc8] sm:$0xff]
    %v204 = vld [vmem:[#allocation7 + $0xd0] sm:$0xff]
    %v205 = vld [vmem:[#allocation7 + $0xd8] sm:$0xff]
    %v206 = vld [vmem:[#allocation7 + $0xe0] sm:$0xff]
    %v207 = vld [vmem:[#allocation7 + $0xe8] sm:$0xff]
    %v208 = vld [vmem:[#allocation7 + $0xf0] sm:$0xff]
    %v209 = vld [vmem:[#allocation7 + $0xf8] sm:$0xff]
    %v210 = vld [vmem:[%s4] sm:$0x1]
    %v212 = vlaneseq
    %v213 = vshrl.u32 %v212, 7
    %v214 = vsub.s32 0, %v213
    %v215 = vrot.slane %v210, %v214
    %217 = vmatprep.subr.mxu0 0.0
    %218 = vmatpush1.msra.mxu0 %v178
    %219 = vmatprep.subr.mxu0 0.0
    %220 = vmatpush1.msra.mxu0 %v179
    %221 = vmatprep.subr.mxu0 0.0
    %222 = vmatpush1.msra.mxu0 %v180
    %223 = vmatprep.subr.mxu0 0.0
    %224 = vmatpush1.msra.mxu0 %v181
    %225 = vmatprep.subr.mxu0 0.0
    %226 = vmatpush1.msra.mxu0 %v182
    %227 = vmatprep.subr.mxu0 0.0
    %228 = vmatpush1.msra.mxu0 %v183
    %229 = vmatprep.subr.mxu0 0.0
    %230 = vmatpush1.msra.mxu0 %v184
    %231 = vmatprep.subr.mxu0 0.0
    %232 = vmatpush1.msra.mxu0 %v185
    %233 = vmatprep.subr.mxu0 0.0
    %234 = vmatpush1.msra.mxu0 %v186
    %235 = vmatprep.subr.mxu0 0.0
    %236 = vmatpush1.msra.mxu0 %v187
    %237 = vmatprep.subr.mxu0 0.0
    %238 = vmatpush1.msra.mxu0 %v188
    %239 = vmatprep.subr.mxu0 0.0
    %240 = vmatpush1.msra.mxu0 %v189
    %241 = vmatprep.subr.mxu0 0.0
    %242 = vmatpush1.msra.mxu0 %v190
    %243 = vmatprep.subr.mxu0 0.0
    %244 = vmatpush1.msra.mxu0 %v191
    %245 = vmatprep.subr.mxu0 0.0
    %246 = vmatpush1.msra.mxu0 %v192
    %247 = vmatprep.subr.mxu0 0.0
    %248 = vmatpush1.msra.mxu0 %v193
    %249 = vmatprep.subr.mxu0 0.0
    %250 = vmatpush1.msra.mxu0 %v194
    %251 = vmatprep.subr.mxu0 0.0
    %252 = vmatpush1.msra.mxu0 %v195
    %253 = vmatprep.subr.mxu0 0.0
    %254 = vmatpush1.msra.mxu0 %v196
    %255 = vmatprep.subr.mxu0 0.0
    %256 = vmatpush1.msra.mxu0 %v197
    %257 = vmatprep.subr.mxu0 0.0
    %258 = vmatpush1.msra.mxu0 %v198
    %259 = vmatprep.subr.mxu0 0.0
    %260 = vmatpush1.msra.mxu0 %v199
    %261 = vmatprep.subr.mxu0 0.0
    %262 = vmatpush1.msra.mxu0 %v200
    %263 = vmatprep.subr.mxu0 0.0
    %264 = vmatpush1.msra.mxu0 %v201
    %265 = vmatprep.subr.mxu0 0.0
    %266 = vmatpush1.msra.mxu0 %v202
    %267 = vmatprep.subr.mxu0 0.0
    %268 = vmatpush1.msra.mxu0 %v203
    %269 = vmatprep.subr.mxu0 0.0
    %270 = vmatpush1.msra.mxu0 %v204
    %271 = vmatprep.subr.mxu0 0.0
    %272 = vmatpush1.msra.mxu0 %v205
    %273 = vmatprep.subr.mxu0 0.0
    %274 = vmatpush1.msra.mxu0 %v206
    %275 = vmatprep.subr.mxu0 0.0
    %276 = vmatpush1.msra.mxu0 %v207
    %277 = vmatprep.subr.mxu0 0.0
    %278 = vmatpush1.msra.mxu0 %v208
    %279 = vmatprep.subr.mxu0 0.0
    %280 = vmatpush1.msra.mxu0 %v209
    %281 = vmatprep.mubr.f32.mxu0 %v177
    %282 = vmatmul.mubr.f32.gmra.mrb[0].mxu0 %v176
    %v283 = vpop.f32.mrb[0].mxu0
    %v284 = vadd.f32 %v215, %v283
    %v285 = vpop.f32.mrb[0].mxu0
    %286 = vdwg.mxu0
    %287 = vst [vmem:[#allocation8] sm:$0xff] %v284
    // Predicated region
    $region34: #{tpu_custom_call.1} parent=1 // pred_check
      _
    $region35: #{tpu_custom_call.1} parent=1 // pred_check_branch
      %289 = sbr.rel (0) target = $region37
    $region36: #{tpu_custom_call.1} parent=1 // pred_region
      %s291 = ssub.s32 128, 128
      %292 = vsyncadd [#allocation4], %s291
      %s294 = sshll.u32 [#allocation8], 4
      %s295 = int_to_ptr.vmem [resolvable:$true] %s294
      %297 = dma.vmem_to_hbm [thread:$0]  %s295, 128, %s5, [#allocation4]
    $region37: #{tpu_custom_call.1} parent=1 // pred_fallthru
      _
    // Predicated region
    $region38: #{tpu_custom_call.1} parent=1 // pred_check
      _
    $region39: #{tpu_custom_call.1} parent=1 // pred_check_branch
      %299 = sbr.rel (0) target = $region41
    $region40: #{tpu_custom_call.1} parent=1 // pred_region
      %300 = dma.done [#allocation4], 128
    $region41: #{tpu_custom_call.1} parent=1 // pred_fallthru
      _
    %301 = vsyncpa [#allocation3], 1
    %302 = vsyncpa [#allocation6], 1
    %303 = vsyncpa [#allocation4], 1

</llo_original>
